<compile_context>
chip_gen: v7x
topology: tpu7x:2x2x1
jax: 0.10.0
libtpu: 0.0.40
codegen_flags: <defaults>
</compile_context>

<pallas_src>
import functools

import numpy as np
import jax
import jax.numpy as jnp
from jax.experimental import pallas as pl
from jax.experimental.pallas import tpu as pltpu


def _deriv_conv_kernel_static(x_ref, o_ref, *, taps, kernel_size):
    """K*K-tap 'valid' cross-correlation with compile-time taps (1/resol folded).

    x_ref : (H, W, TB)   VMEM   batch on the lane axis
    o_ref : (Ho, Wo, TB) VMEM
    """
    k = kernel_size
    ho, wo = o_ref.shape[0], o_ref.shape[1]

    acc = None
    for ki in range(k):
        for kj in range(k):
            t = taps[ki * k + kj]
            if t == 0.0:
                continue  # skip zero taps entirely
            win = x_ref[ki:ki + ho, kj:kj + wo, :]
            if acc is None:
                acc = win if t == 1.0 else (-win if t == -1.0 else t * win)
            elif t == 1.0:
                acc = acc + win
            elif t == -1.0:
                acc = acc - win
            else:
                acc = acc + t * win
    if acc is None:  # degenerate all-zero filter
        acc = jnp.zeros(o_ref.shape, jnp.float32)
    o_ref[...] = acc.astype(o_ref.dtype)


def _deriv_conv_kernel_smem(filt_ref, x_ref, o_ref, *, kernel_size):
    """Fallback for traced filters: taps live in SMEM as a flat (K*K,) vector."""
    k = kernel_size
    ho, wo = o_ref.shape[0], o_ref.shape[1]

    acc = filt_ref[0] * x_ref[0:ho, 0:wo, :]
    for ki in range(k):
        for kj in range(k):
            if ki == 0 and kj == 0:
                continue
            acc = acc + filt_ref[ki * k + kj] * x_ref[ki:ki + ho, kj:kj + wo, :]
    o_ref[...] = acc.astype(o_ref.dtype)


def _static_taps(filt, resol, k):
    """Tuple of python-float taps (scaled by 1/resol) if concrete, else None."""
    try:
        taps = np.asarray(jax.device_get(filt), np.float64).reshape(k * k)
        r = float(np.asarray(jax.device_get(resol), np.float64))
    except Exception:
        return None
    return tuple(float(t) / r for t in taps)


def _choose_tb(n, h, w, ho, wo, vmem_block_bytes):
    """Images per grid step (lane axis of the block).

    Accounts for the (8,128)-padded input AND output blocks and the x2 double
    buffering of both.  Returns the full batch when N <= 128, otherwise a
    multiple of 128 capped so the grid keeps >= 2 blocks (v7x dual-TC).
    """
    pad8 = lambda v: -(-v // 8) * 8
    # Bytes per 128-image lane group: (in + out) blocks, double buffered, f32.
    per_group = 2 * 4 * 128 * (h * pad8(w) + ho * pad8(wo))
    budget_groups = max(1, vmem_block_bytes // per_group)
    if n <= 128:
        return n  # full-extent lane dim: always layout-legal
    n_groups = -(-n // 128)
    tb_groups = max(1, min(budget_groups, -(-n_groups // 2)))
    return tb_groups * 128


def conv2d_derivative(x, der_filter, resol, *, vmem_block_bytes=16 * 1024 * 1024):
    """x: (N, 1, H, W) f32, der_filter: (1, 1, K, K), resol: python/0-d float."""
    n, c, h, w = x.shape
    assert c == 1, "Conv2dDerivative uses a single input channel"
    filt = jnp.asarray(der_filter, jnp.float32)
    k = filt.shape[-1]
    ho, wo = h - (k - 1), w - (k - 1)

    # Lane-major batch layout: (N,1,H,W) -> (H,W,N) so batch rides the 128-lane axis.
    x_hwn = jnp.transpose(x.reshape(n, h, w), (1, 2, 0))

    tb = _choose_tb(n, h, w, ho, wo, vmem_block_bytes)
    grid = (pl.cdiv(n, tb),)

    # Real per-step VMEM footprint (padded in + out blocks, double buffered).
    pad8 = lambda v: -(-v // 8) * 8
    pad128 = lambda v: -(-v // 128) * 128
    footprint = 2 * 4 * pad128(tb) * (h * pad8(w) + ho * pad8(wo))
    vmem_limit = max(footprint + (8 << 20), 16 << 20)

    x_spec = pl.BlockSpec((h, w, tb), lambda b: (0, 0, b))
    out_spec = pl.BlockSpec((ho, wo, tb), lambda b: (0, 0, b))

    taps = _static_taps(filt, resol, k)
    if taps is not None:
        kernel = functools.partial(_deriv_conv_kernel_static, taps=taps, kernel_size=k)
        in_specs = [x_spec]
        operands = (x_hwn,)
    else:
        kernel = functools.partial(_deriv_conv_kernel_smem, kernel_size=k)
        filt_flat = (filt / jnp.asarray(resol, jnp.float32)).reshape(k * k)
        in_specs = [pl.BlockSpec(memory_space=pltpu.MemorySpace.SMEM), x_spec]
        operands = (filt_flat, x_hwn)

    out = pl.pallas_call(
        kernel,
        out_shape=jax.ShapeDtypeStruct((ho, wo, n), jnp.float32),
        grid=grid,
        in_specs=in_specs,
        out_specs=out_spec,
        compiler_params=pltpu.CompilerParams(
            dimension_semantics=("parallel",),
            vmem_limit_bytes=vmem_limit,
        ),
    )(*operands)

    # (Ho, Wo, N) -> (N, 1, Ho, Wo)  (glue)
    return jnp.transpose(out, (2, 0, 1)).reshape(n, 1, ho, wo)


def _reference(x, der_filter, resol):
    y = jax.lax.conv_general_dilated(
        x, jnp.asarray(der_filter, jnp.float32), window_strides=(1, 1),
        padding="VALID", dimension_numbers=("NCHW", "OIHW", "NCHW"))
    return y / resol


if __name__ == "__main__":
    key = jax.random.PRNGKey(0)

    K = 3
    resol = 0.01  # e.g. dx**2 for a Laplacian derivative operator

    # Deterministic derivative filter (2D Laplacian stencil), shape (1, 1, 3, 3)
    # matching nn.Conv2d(1, 1, 3).weight.
    der_filter = jnp.array(
        [[[[0.0, 1.0, 0.0],
           [1.0, -4.0, 1.0],
           [0.0, 1.0, 0.0]]]], dtype=jnp.float32)

    # Case 1: tiny batch (single full-extent block).
    N, C, H, W = 2, 1, 16, 16
    x = jax.random.normal(key, (N, C, H, W), dtype=jnp.float32)
    y = conv2d_derivative(x, der_filter, resol)
    jax.block_until_ready(y)
    y_ref = _reference(x, der_filter, resol)
    assert y.shape == (N, 1, H - 2, W - 2), y.shape
    assert jnp.allclose(y, y_ref, atol=1e-4, rtol=1e-4), "mismatch vs reference (N=2)"

    # Case 2: larger batch exercising the multi-block, 128-lane-aligned path.
    N2 = 256
    x2 = jax.random.normal(jax.random.PRNGKey(1), (N2, 1, H, W), dtype=jnp.float32)
    y2 = conv2d_derivative(x2, der_filter, resol)
    jax.block_until_ready(y2)
    y2_ref = _reference(x2, der_filter, resol)
    assert y2.shape == (N2, 1, H - 2, W - 2), y2.shape
    assert jnp.allclose(y2, y2_ref, atol=1e-4, rtol=1e-4), "mismatch vs reference (N=256)"

    print("KERNEL_OK")
</pallas_src>

<mosaic_0001>
module attributes {stable_mosaic.version = 11 : i64} {
  func.func @_deriv_conv_kernel_static(%arg0: i32, %arg1: memref<16x16x2xf32, #tpu.memory_space<vmem>>, %arg2: memref<14x14x2xf32, #tpu.memory_space<vmem>>) attributes {dimension_semantics = [#tpu.dimension_semantics<parallel>], iteration_bounds = array<i64: 1>, scalar_prefetch = 0 : i64, scratch_operands = 0 : i64, tpu.core_type = #tpu.core_type<tc>, window_params = [{transform_indices = @transform_0, window_bounds = array<i64: 16, 16, 2>}, {transform_indices = @transform_1, window_bounds = array<i64: 14, 14, 2>}]} {
    %c0 = arith.constant 0 : index
    %c1 = arith.constant 1 : index
    %c0_0 = arith.constant 0 : index
    %0 = vector.load %arg1[%c0, %c1, %c0_0] : memref<16x16x2xf32, #tpu.memory_space<vmem>>, vector<14x14x2xf32>
    %cst = arith.constant 1.000000e+02 : f32
    %1 = vector.broadcast %cst : f32 to vector<14x14x2xf32>
    %2 = arith.mulf %1, %0 : vector<14x14x2xf32>
    %c1_1 = arith.constant 1 : index
    %c0_2 = arith.constant 0 : index
    %c0_3 = arith.constant 0 : index
    %3 = vector.load %arg1[%c1_1, %c0_2, %c0_3] : memref<16x16x2xf32, #tpu.memory_space<vmem>>, vector<14x14x2xf32>
    %cst_4 = arith.constant 1.000000e+02 : f32
    %4 = vector.broadcast %cst_4 : f32 to vector<14x14x2xf32>
    %5 = arith.mulf %4, %3 : vector<14x14x2xf32>
    %6 = arith.addf %2, %5 : vector<14x14x2xf32>
    %c1_5 = arith.constant 1 : index
    %c1_6 = arith.constant 1 : index
    %c0_7 = arith.constant 0 : index
    %7 = vector.load %arg1[%c1_5, %c1_6, %c0_7] : memref<16x16x2xf32, #tpu.memory_space<vmem>>, vector<14x14x2xf32>
    %cst_8 = arith.constant -4.000000e+02 : f32
    %8 = vector.broadcast %cst_8 : f32 to vector<14x14x2xf32>
    %9 = arith.mulf %8, %7 : vector<14x14x2xf32>
    %10 = arith.addf %6, %9 : vector<14x14x2xf32>
    %c1_9 = arith.constant 1 : index
    %c2 = arith.constant 2 : index
    %c0_10 = arith.constant 0 : index
    %11 = vector.load %arg1[%c1_9, %c2, %c0_10] : memref<16x16x2xf32, #tpu.memory_space<vmem>>, vector<14x14x2xf32>
    %cst_11 = arith.constant 1.000000e+02 : f32
    %12 = vector.broadcast %cst_11 : f32 to vector<14x14x2xf32>
    %13 = arith.mulf %12, %11 : vector<14x14x2xf32>
    %14 = arith.addf %10, %13 : vector<14x14x2xf32>
    %c2_12 = arith.constant 2 : index
    %c1_13 = arith.constant 1 : index
    %c0_14 = arith.constant 0 : index
    %15 = vector.load %arg1[%c2_12, %c1_13, %c0_14] : memref<16x16x2xf32, #tpu.memory_space<vmem>>, vector<14x14x2xf32>
    %cst_15 = arith.constant 1.000000e+02 : f32
    %16 = vector.broadcast %cst_15 : f32 to vector<14x14x2xf32>
    %17 = arith.mulf %16, %15 : vector<14x14x2xf32>
    %18 = arith.addf %14, %17 : vector<14x14x2xf32>
    %c0_16 = arith.constant 0 : index
    %c0_17 = arith.constant 0 : index
    %c0_18 = arith.constant 0 : index
    %19 = vector.load %arg2[%c0_16, %c0_17, %c0_18] : memref<14x14x2xf32, #tpu.memory_space<vmem>>, vector<14x14x2xf32>
    tpu.vector_store %arg2[%c0_16, %c0_17, %c0_18], %18 {strides = array<i32>} : memref<14x14x2xf32, #tpu.memory_space<vmem>>, vector<14x14x2xf32>,
    return
  }
  func.func @transform_0(%arg0: i32) -> (i32, i32, i32) {
    %c0_i32 = arith.constant 0 : i32
    %c0_i32_0 = arith.constant 0 : i32
    %c0_i32_1 = arith.constant 0 : i32
    return %c0_i32, %c0_i32_0, %arg0 : i32, i32, i32
  }
  func.func @transform_1(%arg0: i32) -> (i32, i32, i32) {
    %c0_i32 = arith.constant 0 : i32
    %c0_i32_0 = arith.constant 0 : i32
    %c0_i32_1 = arith.constant 0 : i32
    return %c0_i32, %c0_i32_0, %arg0 : i32, i32, i32
  }
}

</mosaic_0001>

<llo_original>
// kernel: tpu_custom_call.1
$region0: #{tpu_custom_call.1}
  #allocation0 [shape = 'u32[]', space=smem, size = 0x4, offset = 0x4, fixed_abs, tag = 'smem constant byte address 0x4 - core index']
  #allocation1 [shape = 'u32[144,128]{1,0:T(1,128)}', space=vmem, size = 0x12000, scoped, tag = 'internal scratch']
  %s0 = inlined_call_operand.vmem [shape: f32[16,16,2], index: 0, kind: input, shape index: {}]
  %s1 = inlined_call_operand.vmem [shape: f32[14,14,2], index: 1, kind: output, shape index: {}]
  %s2 = sld [smem:[#allocation0]]
  $region14: #{tpu_custom_call.1} parent=0
    _
  %s4 = ssub.s32 1, %s2
  %s5 = scalar_select 0, %s4, %s2
  // Predicated region
  $region2: #{tpu_custom_call.1} parent=0 // pred_check
    _
  $region3: #{tpu_custom_call.1} parent=0 // pred_check_branch
    %7 = sbr.rel (0) target = $region5
  $region4: #{tpu_custom_call.1} parent=0 // pred_region
    _
  $region5: #{tpu_custom_call.1} parent=0 // pred_fallthru
    _
  %v8 = vld [vmem:[%s0 + $0x1] sm:$0xff]
  %v9 = vld [vmem:[%s0 + $0x9] sm:$0x3f]
  %v10 = vld [vmem:[%s0 + $0x11] sm:$0xff]
  %v11 = vld [vmem:[%s0 + $0x19] sm:$0x3f]
  %v12 = vld [vmem:[%s0 + $0x21] sm:$0xff]
  %v13 = vld [vmem:[%s0 + $0x29] sm:$0x3f]
  %v14 = vld [vmem:[%s0 + $0x31] sm:$0xff]
  %v15 = vld [vmem:[%s0 + $0x39] sm:$0x3f]
  %v16 = vld [vmem:[%s0 + $0x41] sm:$0xff]
  %v17 = vld [vmem:[%s0 + $0x49] sm:$0x3f]
  %v18 = vld [vmem:[%s0 + $0x51] sm:$0xff]
  %v19 = vld [vmem:[%s0 + $0x59] sm:$0x3f]
  %v20 = vld [vmem:[%s0 + $0x61] sm:$0xff]
  %v21 = vld [vmem:[%s0 + $0x69] sm:$0x3f]
  %v22 = vld [vmem:[%s0 + $0x71] sm:$0xff]
  %v23 = vld [vmem:[%s0 + $0x79] sm:$0x3f]
  %v24 = vld [vmem:[%s0 + $0x81] sm:$0xff]
  %v25 = vld [vmem:[%s0 + $0x89] sm:$0x3f]
  %v26 = vld [vmem:[%s0 + $0x91] sm:$0xff]
  %v27 = vld [vmem:[%s0 + $0x99] sm:$0x3f]
  %v28 = vld [vmem:[%s0 + $0xa1] sm:$0xff]
  %v29 = vld [vmem:[%s0 + $0xa9] sm:$0x3f]
  %v30 = vld [vmem:[%s0 + $0xb1] sm:$0xff]
  %v31 = vld [vmem:[%s0 + $0xb9] sm:$0x3f]
  %v32 = vld [vmem:[%s0 + $0xc1] sm:$0xff]
  %v33 = vld [vmem:[%s0 + $0xc9] sm:$0x3f]
  %v34 = vld [vmem:[%s0 + $0xd1] sm:$0xff]
  %v35 = vld [vmem:[%s0 + $0xd9] sm:$0x3f]
  %v36 = vmul.f32 %v8, 100.0
  %v37 = vmul.f32 %v9, 100.0
  %v38 = vmul.f32 %v10, 100.0
  %v39 = vmul.f32 %v11, 100.0
  %v40 = vmul.f32 %v12, 100.0
  %v41 = vmul.f32 %v13, 100.0
  %v42 = vmul.f32 %v14, 100.0
  %v43 = vmul.f32 %v15, 100.0
  %v44 = vmul.f32 %v16, 100.0
  %v45 = vmul.f32 %v17, 100.0
  %v46 = vmul.f32 %v18, 100.0
  %v47 = vmul.f32 %v19, 100.0
  %v48 = vmul.f32 %v20, 100.0
  %v49 = vmul.f32 %v21, 100.0
  %v50 = vmul.f32 %v22, 100.0
  %v51 = vmul.f32 %v23, 100.0
  %v52 = vmul.f32 %v24, 100.0
  %v53 = vmul.f32 %v25, 100.0
  %v54 = vmul.f32 %v26, 100.0
  %v55 = vmul.f32 %v27, 100.0
  %v56 = vmul.f32 %v28, 100.0
  %v57 = vmul.f32 %v29, 100.0
  %v58 = vmul.f32 %v30, 100.0
  %v59 = vmul.f32 %v31, 100.0
  %v60 = vmul.f32 %v32, 100.0
  %v61 = vmul.f32 %v33, 100.0
  %v62 = vmul.f32 %v34, 100.0
  %v63 = vmul.f32 %v35, 100.0
  %s64 = scalar_lea.vmem %s0, 16
  %v65 = vld [vmem:[%s64] sm:$0xff]
  %v66 = vld [vmem:[%s64 + $0x8] sm:$0x3f]
  %v67 = vld [vmem:[%s64 + $0x10] sm:$0xff]
  %v68 = vld [vmem:[%s64 + $0x18] sm:$0x3f]
  %v69 = vld [vmem:[%s64 + $0x20] sm:$0xff]
  %v70 = vld [vmem:[%s64 + $0x28] sm:$0x3f]
  %v71 = vld [vmem:[%s64 + $0x30] sm:$0xff]
  %v72 = vld [vmem:[%s64 + $0x38] sm:$0x3f]
  %v73 = vld [vmem:[%s64 + $0x40] sm:$0xff]
  %v74 = vld [vmem:[%s64 + $0x48] sm:$0x3f]
  %v75 = vld [vmem:[%s64 + $0x50] sm:$0xff]
  %v76 = vld [vmem:[%s64 + $0x58] sm:$0x3f]
  %v77 = vld [vmem:[%s64 + $0x60] sm:$0xff]
  %v78 = vld [vmem:[%s64 + $0x68] sm:$0x3f]
  %v79 = vld [vmem:[%s64 + $0x70] sm:$0xff]
  %v80 = vld [vmem:[%s64 + $0x78] sm:$0x3f]
  %v81 = vld [vmem:[%s64 + $0x80] sm:$0xff]
  %v82 = vld [vmem:[%s64 + $0x88] sm:$0x3f]
  %v83 = vld [vmem:[%s64 + $0x90] sm:$0xff]
  %v84 = vld [vmem:[%s64 + $0x98] sm:$0x3f]
  %v85 = vld [vmem:[%s64 + $0xa0] sm:$0xff]
  %v86 = vld [vmem:[%s64 + $0xa8] sm:$0x3f]
  %v87 = vld [vmem:[%s64 + $0xb0] sm:$0xff]
  %v88 = vld [vmem:[%s64 + $0xb8] sm:$0x3f]
  %v89 = vld [vmem:[%s64 + $0xc0] sm:$0xff]
  %v90 = vld [vmem:[%s64 + $0xc8] sm:$0x3f]
  %v91 = vld [vmem:[%s64 + $0xd0] sm:$0xff]
  %v92 = vld [vmem:[%s64 + $0xd8] sm:$0x3f]
  %v93 = vmul.f32 %v65, 100.0
  %v94 = vmul.f32 %v66, 100.0
  %v95 = vmul.f32 %v67, 100.0
  %v96 = vmul.f32 %v68, 100.0
  %v97 = vmul.f32 %v69, 100.0
  %v98 = vmul.f32 %v70, 100.0
  %v99 = vmul.f32 %v71, 100.0
  %v100 = vmul.f32 %v72, 100.0
  %v101 = vmul.f32 %v73, 100.0
  %v102 = vmul.f32 %v74, 100.0
  %v103 = vmul.f32 %v75, 100.0
  %v104 = vmul.f32 %v76, 100.0
  %v105 = vmul.f32 %v77, 100.0
  %v106 = vmul.f32 %v78, 100.0
  %v107 = vmul.f32 %v79, 100.0
  %v108 = vmul.f32 %v80, 100.0
  %v109 = vmul.f32 %v81, 100.0
  %v110 = vmul.f32 %v82, 100.0
  %v111 = vmul.f32 %v83, 100.0
  %v112 = vmul.f32 %v84, 100.0
  %v113 = vmul.f32 %v85, 100.0
  %v114 = vmul.f32 %v86, 100.0
  %v115 = vmul.f32 %v87, 100.0
  %v116 = vmul.f32 %v88, 100.0
  %v117 = vmul.f32 %v89, 100.0
  %v118 = vmul.f32 %v90, 100.0
  %v119 = vmul.f32 %v91, 100.0
  %v120 = vmul.f32 %v92, 100.0
  %v121 = vadd.f32 %v36, %v93
  %v122 = vadd.f32 %v37, %v94
  %v123 = vadd.f32 %v38, %v95
  %v124 = vadd.f32 %v39, %v96
  %v125 = vadd.f32 %v40, %v97
  %v126 = vadd.f32 %v41, %v98
  %v127 = vadd.f32 %v42, %v99
  %v128 = vadd.f32 %v43, %v100
  %v129 = vadd.f32 %v44, %v101
  %v130 = vadd.f32 %v45, %v102
  %v131 = vadd.f32 %v46, %v103
  %v132 = vadd.f32 %v47, %v104
  %v133 = vadd.f32 %v48, %v105
  %v134 = vadd.f32 %v49, %v106
  %v135 = vadd.f32 %v50, %v107
  %v136 = vadd.f32 %v51, %v108
  %v137 = vadd.f32 %v52, %v109
  %v138 = vadd.f32 %v53, %v110
  %v139 = vadd.f32 %v54, %v111
  %v140 = vadd.f32 %v55, %v112
  %v141 = vadd.f32 %v56, %v113
  %v142 = vadd.f32 %v57, %v114
  %v143 = vadd.f32 %v58, %v115
  %v144 = vadd.f32 %v59, %v116
  %v145 = vadd.f32 %v60, %v117
  %v146 = vadd.f32 %v61, %v118
  %v147 = vadd.f32 %v62, %v119
  %v148 = vadd.f32 %v63, %v120
  %v149 = vld [vmem:[%s64 + $0x1] sm:$0xff]
  %v150 = vld [vmem:[%s64 + $0x9] sm:$0x3f]
  %v151 = vld [vmem:[%s64 + $0x11] sm:$0xff]
  %v152 = vld [vmem:[%s64 + $0x19] sm:$0x3f]
  %v153 = vld [vmem:[%s64 + $0x21] sm:$0xff]
  %v154 = vld [vmem:[%s64 + $0x29] sm:$0x3f]
  %v155 = vld [vmem:[%s64 + $0x31] sm:$0xff]
  %v156 = vld [vmem:[%s64 + $0x39] sm:$0x3f]
  %v157 = vld [vmem:[%s64 + $0x41] sm:$0xff]
  %v158 = vld [vmem:[%s64 + $0x49] sm:$0x3f]
  %v159 = vld [vmem:[%s64 + $0x51] sm:$0xff]
  %v160 = vld [vmem:[%s64 + $0x59] sm:$0x3f]
  %v161 = vld [vmem:[%s64 + $0x61] sm:$0xff]
  %v162 = vld [vmem:[%s64 + $0x69] sm:$0x3f]
  %v163 = vld [vmem:[%s64 + $0x71] sm:$0xff]
  %v164 = vld [vmem:[%s64 + $0x79] sm:$0x3f]
  %v165 = vld [vmem:[%s64 + $0x81] sm:$0xff]
  %v166 = vld [vmem:[%s64 + $0x89] sm:$0x3f]
  %v167 = vld [vmem:[%s64 + $0x91] sm:$0xff]
  %v168 = vld [vmem:[%s64 + $0x99] sm:$0x3f]
  %v169 = vld [vmem:[%s64 + $0xa1] sm:$0xff]
  %v170 = vld [vmem:[%s64 + $0xa9] sm:$0x3f]
  %v171 = vld [vmem:[%s64 + $0xb1] sm:$0xff]
  %v172 = vld [vmem:[%s64 + $0xb9] sm:$0x3f]
  %v173 = vld [vmem:[%s64 + $0xc1] sm:$0xff]
  %v174 = vld [vmem:[%s64 + $0xc9] sm:$0x3f]
  %v175 = vld [vmem:[%s64 + $0xd1] sm:$0xff]
  %v176 = vld [vmem:[%s64 + $0xd9] sm:$0x3f]
  %v177 = vmul.f32 %v149, -400.0
  %v178 = vmul.f32 %v150, -400.0
  %v179 = vmul.f32 %v151, -400.0
  %v180 = vmul.f32 %v152, -400.0
  %v181 = vmul.f32 %v153, -400.0
  %v182 = vmul.f32 %v154, -400.0
  %v183 = vmul.f32 %v155, -400.0
  %v184 = vmul.f32 %v156, -400.0
  %v185 = vmul.f32 %v157, -400.0
  %v186 = vmul.f32 %v158, -400.0
  %v187 = vmul.f32 %v159, -400.0
  %v188 = vmul.f32 %v160, -400.0
  %v189 = vmul.f32 %v161, -400.0
  %v190 = vmul.f32 %v162, -400.0
  %v191 = vmul.f32 %v163, -400.0
  %v192 = vmul.f32 %v164, -400.0
  %v193 = vmul.f32 %v165, -400.0
  %v194 = vmul.f32 %v166, -400.0
  %v195 = vmul.f32 %v167, -400.0
  %v196 = vmul.f32 %v168, -400.0
  %v197 = vmul.f32 %v169, -400.0
  %v198 = vmul.f32 %v170, -400.0
  %v199 = vmul.f32 %v171, -400.0
  %v200 = vmul.f32 %v172, -400.0
  %v201 = vmul.f32 %v173, -400.0
  %v202 = vmul.f32 %v174, -400.0
  %v203 = vmul.f32 %v175, -400.0
  %v204 = vmul.f32 %v176, -400.0
  %v205 = vadd.f32 %v121, %v177
  %v206 = vadd.f32 %v122, %v178
  %v207 = vadd.f32 %v123, %v179
  %v208 = vadd.f32 %v124, %v180
  %v209 = vadd.f32 %v125, %v181
  %v210 = vadd.f32 %v126, %v182
  %v211 = vadd.f32 %v127, %v183
  %v212 = vadd.f32 %v128, %v184
  %v213 = vadd.f32 %v129, %v185
  %v214 = vadd.f32 %v130, %v186
  %v215 = vadd.f32 %v131, %v187
  %v216 = vadd.f32 %v132, %v188
  %v217 = vadd.f32 %v133, %v189
  %v218 = vadd.f32 %v134, %v190
  %v219 = vadd.f32 %v135, %v191
  %v220 = vadd.f32 %v136, %v192
  %v221 = vadd.f32 %v137, %v193
  %v222 = vadd.f32 %v138, %v194
  %v223 = vadd.f32 %v139, %v195
  %v224 = vadd.f32 %v140, %v196
  %v225 = vadd.f32 %v141, %v197
  %v226 = vadd.f32 %v142, %v198
  %v227 = vadd.f32 %v143, %v199
  %v228 = vadd.f32 %v144, %v200
  %v229 = vadd.f32 %v145, %v201
  %v230 = vadd.f32 %v146, %v202
  %v231 = vadd.f32 %v147, %v203
  %v232 = vadd.f32 %v148, %v204
  %v233 = vld [vmem:[%s64 + $0x2] sm:$0xff]
  %v234 = vld [vmem:[%s64 + $0xa] sm:$0x3f]
  %v235 = vld [vmem:[%s64 + $0x12] sm:$0xff]
  %v236 = vld [vmem:[%s64 + $0x1a] sm:$0x3f]
  %v237 = vld [vmem:[%s64 + $0x22] sm:$0xff]
  %v238 = vld [vmem:[%s64 + $0x2a] sm:$0x3f]
  %v239 = vld [vmem:[%s64 + $0x32] sm:$0xff]
  %v240 = vld [vmem:[%s64 + $0x3a] sm:$0x3f]
  %v241 = vld [vmem:[%s64 + $0x42] sm:$0xff]
  %v242 = vld [vmem:[%s64 + $0x4a] sm:$0x3f]
  %v243 = vld [vmem:[%s64 + $0x52] sm:$0xff]
  %v244 = vld [vmem:[%s64 + $0x5a] sm:$0x3f]
  %v245 = vld [vmem:[%s64 + $0x62] sm:$0xff]
  %v246 = vld [vmem:[%s64 + $0x6a] sm:$0x3f]
  %v247 = vld [vmem:[%s64 + $0x72] sm:$0xff]
  %v248 = vld [vmem:[%s64 + $0x7a] sm:$0x3f]
  %v249 = vld [vmem:[%s64 + $0x82] sm:$0xff]
  %v250 = vld [vmem:[%s64 + $0x8a] sm:$0x3f]
  %v251 = vld [vmem:[%s64 + $0x92] sm:$0xff]
  %v252 = vld [vmem:[%s64 + $0x9a] sm:$0x3f]
  %v253 = vld [vmem:[%s64 + $0xa2] sm:$0xff]
  %v254 = vld [vmem:[%s64 + $0xaa] sm:$0x3f]
  %v255 = vld [vmem:[%s64 + $0xb2] sm:$0xff]
  %v256 = vld [vmem:[%s64 + $0xba] sm:$0x3f]
  %v257 = vld [vmem:[%s64 + $0xc2] sm:$0xff]
  %v258 = vld [vmem:[%s64 + $0xca] sm:$0x3f]
  %v259 = vld [vmem:[%s64 + $0xd2] sm:$0xff]
  %v260 = vld [vmem:[%s64 + $0xda] sm:$0x3f]
  %v261 = vmul.f32 %v233, 100.0
  %v262 = vmul.f32 %v234, 100.0
  %v263 = vmul.f32 %v235, 100.0
  %v264 = vmul.f32 %v236, 100.0
  %v265 = vmul.f32 %v237, 100.0
  %v266 = vmul.f32 %v238, 100.0
  %v267 = vmul.f32 %v239, 100.0
  %v268 = vmul.f32 %v240, 100.0
  %v269 = vmul.f32 %v241, 100.0
  %v270 = vmul.f32 %v242, 100.0
  %v271 = vmul.f32 %v243, 100.0
  %v272 = vmul.f32 %v244, 100.0
  %v273 = vmul.f32 %v245, 100.0
  %v274 = vmul.f32 %v246, 100.0
  %v275 = vmul.f32 %v247, 100.0
  %v276 = vmul.f32 %v248, 100.0
  %v277 = vmul.f32 %v249, 100.0
  %v278 = vmul.f32 %v250, 100.0
  %v279 = vmul.f32 %v251, 100.0
  %v280 = vmul.f32 %v252, 100.0
  %v281 = vmul.f32 %v253, 100.0
  %v282 = vmul.f32 %v254, 100.0
  %v283 = vmul.f32 %v255, 100.0
  %v284 = vmul.f32 %v256, 100.0
  %v285 = vmul.f32 %v257, 100.0
  %v286 = vmul.f32 %v258, 100.0
  %v287 = vmul.f32 %v259, 100.0
  %v288 = vmul.f32 %v260, 100.0
  %v289 = vadd.f32 %v205, %v261
  %v290 = vadd.f32 %v206, %v262
  %v291 = vadd.f32 %v207, %v263
  %v292 = vadd.f32 %v208, %v264
  %v293 = vadd.f32 %v209, %v265
  %v294 = vadd.f32 %v210, %v266
  %v295 = vadd.f32 %v211, %v267
  %v296 = vadd.f32 %v212, %v268
  %v297 = vadd.f32 %v213, %v269
  %v298 = vadd.f32 %v214, %v270
  %v299 = vadd.f32 %v215, %v271
  %v300 = vadd.f32 %v216, %v272
  %v301 = vadd.f32 %v217, %v273
  %v302 = vadd.f32 %v218, %v274
  %v303 = vadd.f32 %v219, %v275
  %v304 = vadd.f32 %v220, %v276
  %v305 = vadd.f32 %v221, %v277
  %v306 = vadd.f32 %v222, %v278
  %v307 = vadd.f32 %v223, %v279
  %v308 = vadd.f32 %v224, %v280
  %v309 = vadd.f32 %v225, %v281
  %v310 = vadd.f32 %v226, %v282
  %v311 = vadd.f32 %v227, %v283
  %v312 = vadd.f32 %v228, %v284
  %v313 = vadd.f32 %v229, %v285
  %v314 = vadd.f32 %v230, %v286
  %v315 = vadd.f32 %v231, %v287
  %v316 = vadd.f32 %v232, %v288
  %s317 = scalar_lea.vmem %s0, 32
  %v318 = vld [vmem:[%s317 + $0x1] sm:$0xff]
  %v319 = vld [vmem:[%s317 + $0x9] sm:$0x3f]
  %v320 = vld [vmem:[%s317 + $0x11] sm:$0xff]
  %v321 = vld [vmem:[%s317 + $0x19] sm:$0x3f]
  %v322 = vld [vmem:[%s317 + $0x21] sm:$0xff]
  %v323 = vld [vmem:[%s317 + $0x29] sm:$0x3f]
  %v324 = vld [vmem:[%s317 + $0x31] sm:$0xff]
  %v325 = vld [vmem:[%s317 + $0x39] sm:$0x3f]
  %v326 = vld [vmem:[%s317 + $0x41] sm:$0xff]
  %v327 = vld [vmem:[%s317 + $0x49] sm:$0x3f]
  %v328 = vld [vmem:[%s317 + $0x51] sm:$0xff]
  %v329 = vld [vmem:[%s317 + $0x59] sm:$0x3f]
  %v330 = vld [vmem:[%s317 + $0x61] sm:$0xff]
  %v331 = vld [vmem:[%s317 + $0x69] sm:$0x3f]
  %v332 = vld [vmem:[%s317 + $0x71] sm:$0xff]
  %v333 = vld [vmem:[%s317 + $0x79] sm:$0x3f]
  %v334 = vld [vmem:[%s317 + $0x81] sm:$0xff]
  %v335 = vld [vmem:[%s317 + $0x89] sm:$0x3f]
  %v336 = vld [vmem:[%s317 + $0x91] sm:$0xff]
  %v337 = vld [vmem:[%s317 + $0x99] sm:$0x3f]
  %v338 = vld [vmem:[%s317 + $0xa1] sm:$0xff]
  %v339 = vld [vmem:[%s317 + $0xa9] sm:$0x3f]
  %v340 = vld [vmem:[%s317 + $0xb1] sm:$0xff]
  %v341 = vld [vmem:[%s317 + $0xb9] sm:$0x3f]
  %v342 = vld [vmem:[%s317 + $0xc1] sm:$0xff]
  %v343 = vld [vmem:[%s317 + $0xc9] sm:$0x3f]
  %v344 = vld [vmem:[%s317 + $0xd1] sm:$0xff]
  %v345 = vld [vmem:[%s317 + $0xd9] sm:$0x3f]
  %v346 = vmul.f32 %v318, 100.0
  %v347 = vmul.f32 %v319, 100.0
  %v348 = vmul.f32 %v320, 100.0
  %v349 = vmul.f32 %v321, 100.0
  %v350 = vmul.f32 %v322, 100.0
  %v351 = vmul.f32 %v323, 100.0
  %v352 = vmul.f32 %v324, 100.0
  %v353 = vmul.f32 %v325, 100.0
  %v354 = vmul.f32 %v326, 100.0
  %v355 = vmul.f32 %v327, 100.0
  %v356 = vmul.f32 %v328, 100.0
  %v357 = vmul.f32 %v329, 100.0
  %v358 = vmul.f32 %v330, 100.0
  %v359 = vmul.f32 %v331, 100.0
  %v360 = vmul.f32 %v332, 100.0
  %v361 = vmul.f32 %v333, 100.0
  %v362 = vmul.f32 %v334, 100.0
  %v363 = vmul.f32 %v335, 100.0
  %v364 = vmul.f32 %v336, 100.0
  %v365 = vmul.f32 %v337, 100.0
  %v366 = vmul.f32 %v338, 100.0
  %v367 = vmul.f32 %v339, 100.0
  %v368 = vmul.f32 %v340, 100.0
  %v369 = vmul.f32 %v341, 100.0
  %v370 = vmul.f32 %v342, 100.0
  %v371 = vmul.f32 %v343, 100.0
  %v372 = vmul.f32 %v344, 100.0
  %v373 = vmul.f32 %v345, 100.0
  %v374 = vadd.f32 %v289, %v346
  %v375 = vadd.f32 %v290, %v347
  %v376 = vadd.f32 %v291, %v348
  %v377 = vadd.f32 %v292, %v349
  %v378 = vadd.f32 %v293, %v350
  %v379 = vadd.f32 %v294, %v351
  %v380 = vadd.f32 %v295, %v352
  %v381 = vadd.f32 %v296, %v353
  %v382 = vadd.f32 %v297, %v354
  %v383 = vadd.f32 %v298, %v355
  %v384 = vadd.f32 %v299, %v356
  %v385 = vadd.f32 %v300, %v357
  %v386 = vadd.f32 %v301, %v358
  %v387 = vadd.f32 %v302, %v359
  %v388 = vadd.f32 %v303, %v360
  %v389 = vadd.f32 %v304, %v361
  %v390 = vadd.f32 %v305, %v362
  %v391 = vadd.f32 %v306, %v363
  %v392 = vadd.f32 %v307, %v364
  %v393 = vadd.f32 %v308, %v365
  %v394 = vadd.f32 %v309, %v366
  %v395 = vadd.f32 %v310, %v367
  %v396 = vadd.f32 %v311, %v368
  %v397 = vadd.f32 %v312, %v369
  %v398 = vadd.f32 %v313, %v370
  %v399 = vadd.f32 %v314, %v371
  %v400 = vadd.f32 %v315, %v372
  %v401 = vadd.f32 %v316, %v373
  %vm402 = vcmask 15360
  %403 = vst.msk [vmem:[%s1] sm:$0xff] %vm402, %v374
  %vm404 = vcmask 13312
  %405 = vst.msk [vmem:[%s1 + $0x8] sm:$0x3f] %vm404, %v375
  %406 = vst.msk [vmem:[%s1 + $0x10] sm:$0xff] %vm402, %v376
  %407 = vst.msk [vmem:[%s1 + $0x18] sm:$0x3f] %vm404, %v377
  %408 = vst.msk [vmem:[%s1 + $0x20] sm:$0xff] %vm402, %v378
  %409 = vst.msk [vmem:[%s1 + $0x28] sm:$0x3f] %vm404, %v379
  %410 = vst.msk [vmem:[%s1 + $0x30] sm:$0xff] %vm402, %v380
  %411 = vst.msk [vmem:[%s1 + $0x38] sm:$0x3f] %vm404, %v381
  %412 = vst.msk [vmem:[%s1 + $0x40] sm:$0xff] %vm402, %v382
  %413 = vst.msk [vmem:[%s1 + $0x48] sm:$0x3f] %vm404, %v383
  %414 = vst.msk [vmem:[%s1 + $0x50] sm:$0xff] %vm402, %v384
  %415 = vst.msk [vmem:[%s1 + $0x58] sm:$0x3f] %vm404, %v385
  %416 = vst.msk [vmem:[%s1 + $0x60] sm:$0xff] %vm402, %v386
  %417 = vst.msk [vmem:[%s1 + $0x68] sm:$0x3f] %vm404, %v387
  %418 = vst.msk [vmem:[%s1 + $0x70] sm:$0xff] %vm402, %v388
  %419 = vst.msk [vmem:[%s1 + $0x78] sm:$0x3f] %vm404, %v389
  %420 = vst.msk [vmem:[%s1 + $0x80] sm:$0xff] %vm402, %v390
  %421 = vst.msk [vmem:[%s1 + $0x88] sm:$0x3f] %vm404, %v391
  %422 = vst.msk [vmem:[%s1 + $0x90] sm:$0xff] %vm402, %v392
  %423 = vst.msk [vmem:[%s1 + $0x98] sm:$0x3f] %vm404, %v393
  %424 = vst.msk [vmem:[%s1 + $0xa0] sm:$0xff] %vm402, %v394
  %425 = vst.msk [vmem:[%s1 + $0xa8] sm:$0x3f] %vm404, %v395
  %426 = vst.msk [vmem:[%s1 + $0xb0] sm:$0xff] %vm402, %v396
  %427 = vst.msk [vmem:[%s1 + $0xb8] sm:$0x3f] %vm404, %v397
  %428 = vst.msk [vmem:[%s1 + $0xc0] sm:$0xff] %vm402, %v398
  %429 = vst.msk [vmem:[%s1 + $0xc8] sm:$0x3f] %vm404, %v399
  %430 = vst.msk [vmem:[%s1 + $0xd0] sm:$0xff] %vm402, %v400
  %431 = vst.msk [vmem:[%s1 + $0xd8] sm:$0x3f] %vm404, %v401
  // Predicated region
  $region6: #{tpu_custom_call.1} parent=0 // pred_check
    _
  $region7: #{tpu_custom_call.1} parent=0 // pred_check_branch
    %433 = sbr.rel (0) target = $region9
  $region8: #{tpu_custom_call.1} parent=0 // pred_region
    _
  $region9: #{tpu_custom_call.1} parent=0 // pred_fallthru
    _
  // Predicated region
  $region10: #{tpu_custom_call.1} parent=0 // pred_check
    _
  $region11: #{tpu_custom_call.1} parent=0 // pred_check_branch
    %435 = sbr.rel (0) target = $region13
  $region12: #{tpu_custom_call.1} parent=0 // pred_region
    _
  $region13: #{tpu_custom_call.1} parent=0 // pred_fallthru
    _

</llo_original>
